<compile_context>
chip_gen: v7x
topology: tpu7x:2x2x1
jax: 0.10.0
libtpu: 0.0.40
codegen_flags: <defaults>
</compile_context>

<pallas_src>
import functools

import jax
import jax.numpy as jnp
from jax.experimental import pallas as pl
from jax.experimental.pallas import tpu as pltpu

BN_EPS = 1e-5


# --------------------------------------------------------------------------- #
# Kernel
# --------------------------------------------------------------------------- #
def _mtl_kernel(
    x_ref,                       # [TB, D_in]  batch tile (f32 or bf16)
    w1_ref, b1_ref,              # [D_in, H], [1, H]    (BN folded in)
    w2_ref, b2_ref,              # [H, H],    [1, H]    (BN folded in)
    wh1_ref, bh1_ref,            # [H, 3*TH], [1, 3*TH] fused head stage 1
    wh2v_ref, bh2_ref,           # [1, 3*TH], [1, 3]    head stage 2 as row vec (f32)
    out_ref,                     # [TB, 3]  (sigmoid / identity / tanh columns)
    *, matmul_dtype, task_hidden,
):
    def mm(a, w_ref):
        # bf16 (default) operands on the MXU; accumulate/epilogue in f32.
        return jnp.dot(a.astype(matmul_dtype), w_ref[...],
                       preferred_element_type=jnp.float32)

    # Shared layer 1 (Linear+BN folded) -> ReLU  (Dropout = identity at eval)
    h = jnp.maximum(mm(x_ref[...], w1_ref) + b1_ref[...], 0.0)
    # Shared layer 2
    h = jnp.maximum(mm(h, w2_ref) + b2_ref[...], 0.0)
    # Fused head hidden layer: [TB, 3*TH]
    t = jnp.maximum(mm(h, wh1_ref) + bh1_ref[...], 0.0)

    # Head output layer off the MXU: VPU multiply + per-task 64-lane reduce.
    # (Block-diag [192,3] matmul would cost a full weight load / push slot set
    #  for <1% of FLOPs.)  Done in f32 for accuracy.
    th = task_hidden
    tw = t * wh2v_ref[...]                                   # [TB, 3*TH]
    r0 = jnp.sum(tw[:, 0:th],        axis=-1, keepdims=True)  # [TB, 1]
    r1 = jnp.sum(tw[:, th:2 * th],   axis=-1, keepdims=True)
    r2 = jnp.sum(tw[:, 2 * th:3 * th], axis=-1, keepdims=True)

    col = jax.lax.broadcasted_iota(jnp.int32, (t.shape[0], 3), 1)
    raw = jnp.where(col == 0, r0, jnp.where(col == 1, r1, r2)) + bh2_ref[...]

    # Per-column activation: col0 sigmoid, col1 identity, col2 tanh.
    out_ref[...] = jnp.where(
        col == 0, jax.nn.sigmoid(raw),
        jnp.where(col == 2, jnp.tanh(raw), raw))


# --------------------------------------------------------------------------- #
# Parameter preparation (BN folding + head fusion) — pure JAX, done once.
# --------------------------------------------------------------------------- #
def prepare_params(params, *, bn_eps=BN_EPS, matmul_dtype=jnp.bfloat16):
    (w1, b1, g1, be1, m1, v1,
     w2, b2, g2, be2, m2, v2,
     wu1, bu1, wu2, bu2,
     wo1, bo1, wo2, bo2,
     wg1, bg1, wg2, bg2) = params

    def fold(w, b, g, be, m, v):
        scale = g * jax.lax.rsqrt(v + bn_eps)              # [1, H]
        return w * scale, (b - m) * scale + be             # [in, H], [1, H]

    w1f, b1f = fold(w1, b1, g1, be1, m1, v1)
    w2f, b2f = fold(w2, b2, g2, be2, m2, v2)

    # Fuse head stage 1: one [H, 3*TH] matmul.
    wh1 = jnp.concatenate([wu1, wo1, wg1], axis=1)
    bh1 = jnp.concatenate([bu1, bo1, bg1], axis=1)

    # Head stage 2 as a single row vector [1, 3*TH] (consumed on the VPU,
    # kept in f32 regardless of matmul_dtype).
    wh2v = jnp.concatenate([wu2.T, wo2.T, wg2.T], axis=1).astype(jnp.float32)
    bh2 = jnp.concatenate([bu2, bo2, bg2], axis=1).astype(jnp.float32)

    # MXU operands in matmul_dtype (bf16 default); biases stay f32.
    # TODO(synk): fp8 on v7x would need proper requantization, not a cast.
    if matmul_dtype != jnp.float32:
        w1f = w1f.astype(matmul_dtype)
        w2f = w2f.astype(matmul_dtype)
        wh1 = wh1.astype(matmul_dtype)

    return (w1f, b1f, w2f, b2f, wh1, bh1, wh2v, bh2)


# --------------------------------------------------------------------------- #
# Wrapper
# --------------------------------------------------------------------------- #
def _round_up(n, m):
    return ((n + m - 1) // m) * m


def multi_task_forward(x, prepared, *, block_rows=4096,
                       matmul_dtype=jnp.bfloat16):
    """x: [B, input_dim] (f32 or bf16), prepared = prepare_params(params).
    Returns (user_satisfaction, operator_profit, grid_friendliness),
    each [B, 1] float32."""
    B, d_in = x.shape
    w1f, b1f, w2f, b2f, wh1, bh1, wh2v, bh2 = prepared
    hidden = w2f.shape[0]
    th3 = wh1.shape[1]
    task_hidden = th3 // 3

    # Batch tile: multiple of 8 sublanes, capped at block_rows, and capped at
    # ceil(B/2) so the parallel grid has >=2 steps for v7x's two TensorCores.
    half = _round_up(max((B + 1) // 2, 8), 8)
    tb = max(8, min(block_rows, half))
    b_pad = _round_up(B, tb)
    if b_pad != B:
        x = jnp.pad(x, ((0, b_pad - B), (0, 0)))

    # Explicit scoped-VMEM budget from the actual footprint (+30% headroom),
    # floored at the common 32 MiB default, capped below v7x's 64 MiB physical.
    mm_isz = jnp.dtype(matmul_dtype).itemsize
    w_bytes = sum(int(a.size) * a.dtype.itemsize for a in prepared)
    stream_bytes = 2 * tb * d_in * x.dtype.itemsize + 2 * tb * 3 * 4
    tmp_bytes = tb * (2 * hidden * 4 + th3 * 4
                      + (d_in + hidden + th3) * mm_isz + 48)
    vmem_limit = int(1.3 * (2 * w_bytes + stream_bytes + tmp_bytes))
    vmem_limit = max(32 << 20, min(vmem_limit, 56 << 20))

    const_map = lambda i: (0, 0)
    kernel = functools.partial(_mtl_kernel, matmul_dtype=matmul_dtype,
                               task_hidden=task_hidden)

    out = pl.pallas_call(
        kernel,
        out_shape=jax.ShapeDtypeStruct((b_pad, 3), jnp.float32),
        grid=(b_pad // tb,),
        in_specs=[
            pl.BlockSpec((tb, d_in), lambda i: (i, 0)),     # x: tiled over batch
            pl.BlockSpec(w1f.shape, const_map),             # weights: VMEM-resident
            pl.BlockSpec(b1f.shape, const_map),
            pl.BlockSpec(w2f.shape, const_map),
            pl.BlockSpec(b2f.shape, const_map),
            pl.BlockSpec(wh1.shape, const_map),
            pl.BlockSpec(bh1.shape, const_map),
            pl.BlockSpec(wh2v.shape, const_map),
            pl.BlockSpec(bh2.shape, const_map),
        ],
        out_specs=pl.BlockSpec((tb, 3), lambda i: (i, 0)),  # lane-packed [TB, 3]
        compiler_params=pltpu.CompilerParams(
            dimension_semantics=("parallel",),              # v7x: both TCs
            vmem_limit_bytes=vmem_limit),
    )(x, w1f, b1f, w2f, b2f, wh1, bh1, wh2v, bh2)

    out = out[:B]
    return out[:, 0:1], out[:, 1:2], out[:, 2:3]


# --------------------------------------------------------------------------- #
# Parameter init (PyTorch-style uniform bounds) and pure-JAX reference
# --------------------------------------------------------------------------- #
def init_params(key, input_dim, hidden_dim=128, task_hidden_dim=64):
    """Linear weights stored as [in, out]; 1-D vectors shaped [1, N]."""
    keys = iter(jax.random.split(key, 32))

    def linear(fan_in, fan_out):
        bound = 1.0 / jnp.sqrt(jnp.float32(fan_in))
        w = jax.random.uniform(next(keys), (fan_in, fan_out), jnp.float32, -bound, bound)
        b = jax.random.uniform(next(keys), (1, fan_out), jnp.float32, -bound, bound)
        return w, b

    def batchnorm(n):
        gamma = jnp.ones((1, n), jnp.float32)
        beta = jnp.zeros((1, n), jnp.float32)
        mean = 0.1 * jax.random.normal(next(keys), (1, n), jnp.float32)
        var = 1.0 + 0.1 * jax.random.uniform(next(keys), (1, n), jnp.float32)
        return gamma, beta, mean, var

    w1, b1 = linear(input_dim, hidden_dim)
    g1, be1, m1, v1 = batchnorm(hidden_dim)
    w2, b2 = linear(hidden_dim, hidden_dim)
    g2, be2, m2, v2 = batchnorm(hidden_dim)

    wu1, bu1 = linear(hidden_dim, task_hidden_dim)
    wu2, bu2 = linear(task_hidden_dim, 1)
    wo1, bo1 = linear(hidden_dim, task_hidden_dim)
    wo2, bo2 = linear(task_hidden_dim, 1)
    wg1, bg1 = linear(hidden_dim, task_hidden_dim)
    wg2, bg2 = linear(task_hidden_dim, 1)

    return (
        w1, b1, g1, be1, m1, v1,
        w2, b2, g2, be2, m2, v2,
        wu1, bu1, wu2, bu2,
        wo1, bo1, wo2, bo2,
        wg1, bg1, wg2, bg2,
    )


def reference_forward(x, params):
    """Pure-JAX reference on the UNFOLDED parameters (matches PyTorch eval)."""
    (w1, b1, g1, be1, m1, v1,
     w2, b2, g2, be2, m2, v2,
     wu1, bu1, wu2, bu2,
     wo1, bo1, wo2, bo2,
     wg1, bg1, wg2, bg2) = params

    def bn(h, g, be, m, v):
        return (h - m) * jax.lax.rsqrt(v + BN_EPS) * g + be

    x = x.astype(jnp.float32)
    h = jnp.maximum(bn(x @ w1 + b1, g1, be1, m1, v1), 0.0)
    h = jnp.maximum(bn(h @ w2 + b2, g2, be2, m2, v2), 0.0)

    def head(wa, ba, wb, bb):
        return jnp.maximum(h @ wa + ba, 0.0) @ wb + bb

    return (jax.nn.sigmoid(head(wu1, bu1, wu2, bu2)),
            head(wo1, bo1, wo2, bo2),
            jnp.tanh(head(wg1, bg1, wg2, bg2)))


if __name__ == "__main__":
    INPUT_DIM, HIDDEN, TASK_HIDDEN = 16, 128, 64

    key = jax.random.PRNGKey(0)
    k_x, k_p, k_x2 = jax.random.split(key, 3)
    params = init_params(k_p, INPUT_DIM, HIDDEN, TASK_HIDDEN)

    # --- exact-mode check (f32 MXU operands, tight tolerance, single tile) ---
    prepared_f32 = prepare_params(params, matmul_dtype=jnp.float32)
    B = 8
    x = jax.random.normal(k_x, (B, INPUT_DIM), jnp.float32)
    us, op, gf = jax.block_until_ready(
        multi_task_forward(x, prepared_f32, matmul_dtype=jnp.float32))
    us_r, op_r, gf_r = reference_forward(x, params)
    assert us.shape == (B, 1) and op.shape == (B, 1) and gf.shape == (B, 1)
    assert jnp.allclose(us, us_r, atol=1e-5, rtol=1e-5)
    assert jnp.allclose(op, op_r, atol=1e-5, rtol=1e-5)
    assert jnp.allclose(gf, gf_r, atol=1e-5, rtol=1e-5)

    # --- default bf16 path: larger batch, padding, multi-step parallel grid ---
    prepared = prepare_params(params)                    # bf16 MXU operands
    B2 = 300
    x2 = jax.random.normal(k_x2, (B2, INPUT_DIM), jnp.float32)
    us2, op2, gf2 = jax.block_until_ready(
        multi_task_forward(x2, prepared, block_rows=128))
    us2_r, op2_r, gf2_r = reference_forward(x2, params)
    assert us2.shape == (B2, 1) and op2.shape == (B2, 1) and gf2.shape == (B2, 1)
    assert jnp.allclose(us2, us2_r, atol=5e-2, rtol=5e-2)  # bf16 quantization
    assert jnp.allclose(op2, op2_r, atol=5e-2, rtol=5e-2)
    assert jnp.allclose(gf2, gf2_r, atol=5e-2, rtol=5e-2)

    # --- bf16 input streamed directly (no wrapper-side astype) ---
    x2b = x2.astype(jnp.bfloat16)
    us3, op3, gf3 = jax.block_until_ready(multi_task_forward(x2b, prepared))
    assert jnp.allclose(us3, us2_r, atol=8e-2, rtol=8e-2)
    assert jnp.allclose(op3, op2_r, atol=8e-2, rtol=8e-2)
    assert jnp.allclose(gf3, gf2_r, atol=8e-2, rtol=8e-2)

    print("KERNEL_OK")
</pallas_src>

<mosaic_0001>
module attributes {stable_mosaic.version = 11 : i64} {
  func.func @_mtl_kernel(%arg0: i32, %arg1: memref<8x16xf32, #tpu.memory_space<vmem>>, %arg2: memref<16x128xf32, #tpu.memory_space<vmem>>, %arg3: memref<1x128xf32, #tpu.memory_space<vmem>>, %arg4: memref<128x128xf32, #tpu.memory_space<vmem>>, %arg5: memref<1x128xf32, #tpu.memory_space<vmem>>, %arg6: memref<128x192xf32, #tpu.memory_space<vmem>>, %arg7: memref<1x192xf32, #tpu.memory_space<vmem>>, %arg8: memref<1x192xf32, #tpu.memory_space<vmem>>, %arg9: memref<1x3xf32, #tpu.memory_space<vmem>>, %arg10: memref<8x3xf32, #tpu.memory_space<vmem>>) attributes {dimension_semantics = [#tpu.dimension_semantics<parallel>], iteration_bounds = array<i64: 1>, scalar_prefetch = 0 : i64, scratch_operands = 0 : i64, tpu.core_type = #tpu.core_type<tc>, window_params = [{transform_indices = @transform_0, window_bounds = array<i64: 8, 16>}, {pipeline_mode = #tpu.pipeline_mode<synchronous>, transform_indices = @transform_1, window_bounds = array<i64: 16, 128>}, {pipeline_mode = #tpu.pipeline_mode<synchronous>, transform_indices = @transform_2, window_bounds = array<i64: 1, 128>}, {pipeline_mode = #tpu.pipeline_mode<synchronous>, transform_indices = @transform_3, window_bounds = array<i64: 128, 128>}, {pipeline_mode = #tpu.pipeline_mode<synchronous>, transform_indices = @transform_4, window_bounds = array<i64: 1, 128>}, {pipeline_mode = #tpu.pipeline_mode<synchronous>, transform_indices = @transform_5, window_bounds = array<i64: 128, 192>}, {pipeline_mode = #tpu.pipeline_mode<synchronous>, transform_indices = @transform_6, window_bounds = array<i64: 1, 192>}, {pipeline_mode = #tpu.pipeline_mode<synchronous>, transform_indices = @transform_7, window_bounds = array<i64: 1, 192>}, {pipeline_mode = #tpu.pipeline_mode<synchronous>, transform_indices = @transform_8, window_bounds = array<i64: 1, 3>}, {transform_indices = @transform_9, window_bounds = array<i64: 8, 3>}]} {
    %c0 = arith.constant 0 : index
    %c0_0 = arith.constant 0 : index
    %0 = vector.load %arg1[%c0, %c0_0] : memref<8x16xf32, #tpu.memory_space<vmem>>, vector<8x16xf32>
    %c0_1 = arith.constant 0 : index
    %c0_2 = arith.constant 0 : index
    %1 = vector.load %arg2[%c0_1, %c0_2] : memref<16x128xf32, #tpu.memory_space<vmem>>, vector<16x128xf32>
    %cst = arith.constant dense<0.000000e+00> : vector<8x128xf32>
    %2 = tpu.matmul %0, %1, %cst {dimension_numbers = #tpu.dot_dimension_numbers<[1], [0], [0], [1], [0, 0, 1, 1], [], []>} : vector<8x16xf32>, vector<16x128xf32>, vector<8x128xf32> -> vector<8x128xf32>
    %c0_3 = arith.constant 0 : index
    %c0_4 = arith.constant 0 : index
    %3 = vector.load %arg3[%c0_3, %c0_4] : memref<1x128xf32, #tpu.memory_space<vmem>>, vector<1x128xf32>
    %4 = vector.broadcast %3 : vector<1x128xf32> to vector<8x128xf32>
    %5 = arith.addf %2, %4 : vector<8x128xf32>
    %cst_5 = arith.constant 0.000000e+00 : f32
    %6 = vector.broadcast %cst_5 : f32 to vector<8x128xf32>
    %7 = arith.maximumf %5, %6 : vector<8x128xf32>
    %c0_6 = arith.constant 0 : index
    %c0_7 = arith.constant 0 : index
    %8 = vector.load %arg4[%c0_6, %c0_7] : memref<128x128xf32, #tpu.memory_space<vmem>>, vector<128x128xf32>
    %cst_8 = arith.constant dense<0.000000e+00> : vector<8x128xf32>
    %9 = tpu.matmul %7, %8, %cst_8 {dimension_numbers = #tpu.dot_dimension_numbers<[1], [0], [0], [1], [0, 0, 1, 1], [], []>} : vector<8x128xf32>, vector<128x128xf32>, vector<8x128xf32> -> vector<8x128xf32>
    %c0_9 = arith.constant 0 : index
    %c0_10 = arith.constant 0 : index
    %10 = vector.load %arg5[%c0_9, %c0_10] : memref<1x128xf32, #tpu.memory_space<vmem>>, vector<1x128xf32>
    %11 = vector.broadcast %10 : vector<1x128xf32> to vector<8x128xf32>
    %12 = arith.addf %9, %11 : vector<8x128xf32>
    %cst_11 = arith.constant 0.000000e+00 : f32
    %13 = vector.broadcast %cst_11 : f32 to vector<8x128xf32>
    %14 = arith.maximumf %12, %13 : vector<8x128xf32>
    %c0_12 = arith.constant 0 : index
    %c0_13 = arith.constant 0 : index
    %15 = vector.load %arg6[%c0_12, %c0_13] : memref<128x192xf32, #tpu.memory_space<vmem>>, vector<128x192xf32>
    %cst_14 = arith.constant dense<0.000000e+00> : vector<8x192xf32>
    %16 = tpu.matmul %14, %15, %cst_14 {dimension_numbers = #tpu.dot_dimension_numbers<[1], [0], [0], [1], [0, 0, 1, 1], [], []>} : vector<8x128xf32>, vector<128x192xf32>, vector<8x192xf32> -> vector<8x192xf32>
    %c0_15 = arith.constant 0 : index
    %c0_16 = arith.constant 0 : index
    %17 = vector.load %arg7[%c0_15, %c0_16] : memref<1x192xf32, #tpu.memory_space<vmem>>, vector<1x192xf32>
    %18 = vector.broadcast %17 : vector<1x192xf32> to vector<8x192xf32>
    %19 = arith.addf %16, %18 : vector<8x192xf32>
    %cst_17 = arith.constant 0.000000e+00 : f32
    %20 = vector.broadcast %cst_17 : f32 to vector<8x192xf32>
    %21 = arith.maximumf %19, %20 : vector<8x192xf32>
    %c0_18 = arith.constant 0 : index
    %c0_19 = arith.constant 0 : index
    %22 = vector.load %arg8[%c0_18, %c0_19] : memref<1x192xf32, #tpu.memory_space<vmem>>, vector<1x192xf32>
    %23 = vector.broadcast %22 : vector<1x192xf32> to vector<8x192xf32>
    %24 = arith.mulf %21, %23 : vector<8x192xf32>
    %25 = vector.extract_strided_slice %24 {offsets = [0, 0], sizes = [8, 64], strides = [1, 1]} : vector<8x192xf32> to vector<8x64xf32>
    %cst_20 = arith.constant dense<0.000000e+00> : vector<8xf32>
    %26 = vector.multi_reduction <add>, %25, %cst_20 [1] : vector<8x64xf32> to vector<8xf32>
    %27 = vector.shape_cast %26 : vector<8xf32> to vector<8x1xf32>
    %28 = vector.extract_strided_slice %24 {offsets = [0, 64], sizes = [8, 64], strides = [1, 1]} : vector<8x192xf32> to vector<8x64xf32>
    %cst_21 = arith.constant dense<0.000000e+00> : vector<8xf32>
    %29 = vector.multi_reduction <add>, %28, %cst_21 [1] : vector<8x64xf32> to vector<8xf32>
    %30 = vector.shape_cast %29 : vector<8xf32> to vector<8x1xf32>
    %31 = vector.extract_strided_slice %24 {offsets = [0, 128], sizes = [8, 64], strides = [1, 1]} : vector<8x192xf32> to vector<8x64xf32>
    %cst_22 = arith.constant dense<0.000000e+00> : vector<8xf32>
    %32 = vector.multi_reduction <add>, %31, %cst_22 [1] : vector<8x64xf32> to vector<8xf32>
    %33 = vector.shape_cast %32 : vector<8xf32> to vector<8x1xf32>
    %34 = tpu.iota {dimensions = array<i32: 1>} : vector<8x3xi32>
    %c0_i32 = arith.constant 0 : i32
    %35 = vector.broadcast %c0_i32 : i32 to vector<8x3xi32>
    %36 = arith.cmpi eq, %34, %35 : vector<8x3xi32>
    %c1_i32 = arith.constant 1 : i32
    %37 = vector.broadcast %c1_i32 : i32 to vector<8x3xi32>
    %38 = arith.cmpi eq, %34, %37 : vector<8x3xi32>
    %39 = vector.shape_cast %30 : vector<8x1xf32> to vector<8x1xf32>
    %40 = vector.broadcast %39 : vector<8x1xf32> to vector<8x3xf32>
    %41 = vector.shape_cast %33 : vector<8x1xf32> to vector<8x1xf32>
    %42 = vector.broadcast %41 : vector<8x1xf32> to vector<8x3xf32>
    %43 = arith.select %38, %40, %42 : vector<8x3xi1>, vector<8x3xf32>
    %44 = vector.shape_cast %27 : vector<8x1xf32> to vector<8x1xf32>
    %45 = vector.broadcast %44 : vector<8x1xf32> to vector<8x3xf32>
    %46 = arith.select %36, %45, %43 : vector<8x3xi1>, vector<8x3xf32>
    %c0_23 = arith.constant 0 : index
    %c0_24 = arith.constant 0 : index
    %47 = vector.load %arg9[%c0_23, %c0_24] : memref<1x3xf32, #tpu.memory_space<vmem>>, vector<1x3xf32>
    %48 = vector.broadcast %47 : vector<1x3xf32> to vector<8x3xf32>
    %49 = arith.addf %46, %48 : vector<8x3xf32>
    %c0_i32_25 = arith.constant 0 : i32
    %50 = vector.broadcast %c0_i32_25 : i32 to vector<8x3xi32>
    %51 = arith.cmpi eq, %34, %50 : vector<8x3xi32>
    %52 = arith.negf %49 : vector<8x3xf32>
    %53 = math.exp %52 : vector<8x3xf32>
    %cst_26 = arith.constant 1.000000e+00 : f32
    %54 = vector.broadcast %cst_26 : f32 to vector<8x3xf32>
    %55 = arith.addf %54, %53 : vector<8x3xf32>
    %56 = arith.divf %54, %55 : vector<8x3xf32>
    %c2_i32 = arith.constant 2 : i32
    %57 = vector.broadcast %c2_i32 : i32 to vector<8x3xi32>
    %58 = arith.cmpi eq, %34, %57 : vector<8x3xi32>
    %59 = math.tanh %49 : vector<8x3xf32>
    %60 = arith.select %58, %59, %49 : vector<8x3xi1>, vector<8x3xf32>
    %61 = arith.select %51, %56, %60 : vector<8x3xi1>, vector<8x3xf32>
    %c0_27 = arith.constant 0 : index
    %c0_28 = arith.constant 0 : index
    %62 = vector.load %arg10[%c0_27, %c0_28] : memref<8x3xf32, #tpu.memory_space<vmem>>, vector<8x3xf32>
    tpu.vector_store %arg10[%c0_27, %c0_28], %61 {strides = array<i32>} : memref<8x3xf32, #tpu.memory_space<vmem>>, vector<8x3xf32>,
    return
  }
  func.func @transform_0(%arg0: i32) -> (i32, i32) {
    %c0_i32 = arith.constant 0 : i32
    %c0_i32_0 = arith.constant 0 : i32
    return %arg0, %c0_i32 : i32, i32
  }
  func.func @transform_1(%arg0: i32) -> (i32, i32) {
    %c0_i32 = arith.constant 0 : i32
    %c0_i32_0 = arith.constant 0 : i32
    %c0_i32_1 = arith.constant 0 : i32
    return %c0_i32, %c0_i32_0 : i32, i32
  }
  func.func @transform_2(%arg0: i32) -> (i32, i32) {
    %c0_i32 = arith.constant 0 : i32
    %c0_i32_0 = arith.constant 0 : i32
    %c0_i32_1 = arith.constant 0 : i32
    return %c0_i32, %c0_i32_0 : i32, i32
  }
  func.func @transform_3(%arg0: i32) -> (i32, i32) {
    %c0_i32 = arith.constant 0 : i32
    %c0_i32_0 = arith.constant 0 : i32
    %c0_i32_1 = arith.constant 0 : i32
    return %c0_i32, %c0_i32_0 : i32, i32
  }
  func.func @transform_4(%arg0: i32) -> (i32, i32) {
    %c0_i32 = arith.constant 0 : i32
    %c0_i32_0 = arith.constant 0 : i32
    %c0_i32_1 = arith.constant 0 : i32
    return %c0_i32, %c0_i32_0 : i32, i32
  }
  func.func @transform_5(%arg0: i32) -> (i32, i32) {
    %c0_i32 = arith.constant 0 : i32
    %c0_i32_0 = arith.constant 0 : i32
    %c0_i32_1 = arith.constant 0 : i32
    return %c0_i32, %c0_i32_0 : i32, i32
  }
  func.func @transform_6(%arg0: i32) -> (i32, i32) {
    %c0_i32 = arith.constant 0 : i32
    %c0_i32_0 = arith.constant 0 : i32
    %c0_i32_1 = arith.constant 0 : i32
    return %c0_i32, %c0_i32_0 : i32, i32
  }
  func.func @transform_7(%arg0: i32) -> (i32, i32) {
    %c0_i32 = arith.constant 0 : i32
    %c0_i32_0 = arith.constant 0 : i32
    %c0_i32_1 = arith.constant 0 : i32
    return %c0_i32, %c0_i32_0 : i32, i32
  }
  func.func @transform_8(%arg0: i32) -> (i32, i32) {
    %c0_i32 = arith.constant 0 : i32
    %c0_i32_0 = arith.constant 0 : i32
    %c0_i32_1 = arith.constant 0 : i32
    return %c0_i32, %c0_i32_0 : i32, i32
  }
  func.func @transform_9(%arg0: i32) -> (i32, i32) {
    %c0_i32 = arith.constant 0 : i32
    %c0_i32_0 = arith.constant 0 : i32
    return %arg0, %c0_i32 : i32, i32
  }
}

</mosaic_0001>

<llo_original>
// kernel: tpu_custom_call.1
$region0: #{tpu_custom_call.1}
  #allocation0 [shape = 'u32[]', space=smem, size = 0x4, offset = 0x4, fixed_abs, tag = 'smem constant byte address 0x4 - core index']
  #allocation1 [shape = 'u32[144,128]{1,0:T(1,128)}', space=vmem, size = 0x12000, scoped, tag = 'internal scratch']
  %s0 = inlined_call_operand.vmem [shape: f32[8,16], index: 0, kind: input, shape index: {}]
  %s1 = inlined_call_operand.vmem [shape: f32[16,128], index: 1, kind: input, shape index: {}]
  %s2 = inlined_call_operand.vmem [shape: f32[1,128], index: 2, kind: input, shape index: {}]
  %s3 = inlined_call_operand.vmem [shape: f32[128,128], index: 3, kind: input, shape index: {}]
  %s4 = inlined_call_operand.vmem [shape: f32[1,128], index: 4, kind: input, shape index: {}]
  %s5 = inlined_call_operand.vmem [shape: f32[128,192], index: 5, kind: input, shape index: {}]
  %s6 = inlined_call_operand.vmem [shape: f32[1,192], index: 6, kind: input, shape index: {}]
  %s7 = inlined_call_operand.vmem [shape: f32[1,192], index: 7, kind: input, shape index: {}]
  %s8 = inlined_call_operand.vmem [shape: f32[1,3], index: 8, kind: input, shape index: {}]
  %s9 = inlined_call_operand.vmem [shape: f32[8,3], index: 9, kind: output, shape index: {}]
  %s10 = sld [smem:[#allocation0]]
  $region46: #{tpu_custom_call.1} parent=0
    _
  %s12 = ssub.s32 1, %s10
  %s13 = scalar_select 0, %s12, %s10
  // Predicated region
  $region2: #{tpu_custom_call.1} parent=0 // pred_check
    _
  $region3: #{tpu_custom_call.1} parent=0 // pred_check_branch
    %15 = sbr.rel (0) target = $region5
  $region4: #{tpu_custom_call.1} parent=0 // pred_region
    _
  $region5: #{tpu_custom_call.1} parent=0 // pred_fallthru
    _
  // Predicated region
  $region6: #{tpu_custom_call.1} parent=0 // pred_check
    _
  $region7: #{tpu_custom_call.1} parent=0 // pred_check_branch
    %17 = sbr.rel (0) target = $region9
  $region8: #{tpu_custom_call.1} parent=0 // pred_region
    _
  $region9: #{tpu_custom_call.1} parent=0 // pred_fallthru
    _
  // Predicated region
  $region10: #{tpu_custom_call.1} parent=0 // pred_check
    _
  $region11: #{tpu_custom_call.1} parent=0 // pred_check_branch
    %19 = sbr.rel (0) target = $region13
  $region12: #{tpu_custom_call.1} parent=0 // pred_region
    _
  $region13: #{tpu_custom_call.1} parent=0 // pred_fallthru
    _
  // Predicated region
  $region14: #{tpu_custom_call.1} parent=0 // pred_check
    _
  $region15: #{tpu_custom_call.1} parent=0 // pred_check_branch
    %21 = sbr.rel (0) target = $region17
  $region16: #{tpu_custom_call.1} parent=0 // pred_region
    _
  $region17: #{tpu_custom_call.1} parent=0 // pred_fallthru
    _
  // Predicated region
  $region18: #{tpu_custom_call.1} parent=0 // pred_check
    _
  $region19: #{tpu_custom_call.1} parent=0 // pred_check_branch
    %23 = sbr.rel (0) target = $region21
  $region20: #{tpu_custom_call.1} parent=0 // pred_region
    _
  $region21: #{tpu_custom_call.1} parent=0 // pred_fallthru
    _
  // Predicated region
  $region22: #{tpu_custom_call.1} parent=0 // pred_check
    _
  $region23: #{tpu_custom_call.1} parent=0 // pred_check_branch
    %25 = sbr.rel (0) target = $region25
  $region24: #{tpu_custom_call.1} parent=0 // pred_region
    _
  $region25: #{tpu_custom_call.1} parent=0 // pred_fallthru
    _
  // Predicated region
  $region26: #{tpu_custom_call.1} parent=0 // pred_check
    _
  $region27: #{tpu_custom_call.1} parent=0 // pred_check_branch
    %27 = sbr.rel (0) target = $region29
  $region28: #{tpu_custom_call.1} parent=0 // pred_region
    _
  $region29: #{tpu_custom_call.1} parent=0 // pred_fallthru
    _
  // Predicated region
  $region30: #{tpu_custom_call.1} parent=0 // pred_check
    _
  $region31: #{tpu_custom_call.1} parent=0 // pred_check_branch
    %29 = sbr.rel (0) target = $region33
  $region32: #{tpu_custom_call.1} parent=0 // pred_region
    _
  $region33: #{tpu_custom_call.1} parent=0 // pred_fallthru
    _
  // Predicated region
  $region34: #{tpu_custom_call.1} parent=0 // pred_check
    _
  $region35: #{tpu_custom_call.1} parent=0 // pred_check_branch
    %31 = sbr.rel (0) target = $region37
  $region36: #{tpu_custom_call.1} parent=0 // pred_region
    _
  $region37: #{tpu_custom_call.1} parent=0 // pred_fallthru
    _
  %v32 = vld [vmem:[%s0] sm:$0xff]
  %v33 = vld [vmem:[%s1] sm:$0xff]
  %v34 = vld [vmem:[%s1 + $0x8] sm:$0xff]
  %v35 = vld [vmem:[%s2] sm:$0x1]
  %v37 = vlaneseq
  %v38 = vshrl.u32 %v37, 7
  %v39 = vsub.s32 0, %v38
  %v40 = vrot.slane %v35, %v39
  %vm42 = vcmask 130048
  %v44 = vsel %vm42, %v32, 0
  %46 = vmatprep.subr.mxu0 0.0
  %47 = vmatpush1.msra.mxu0 %v33
  %48 = vmatprep.subr.mxu0 0.0
  %49 = vmatpush1.msra.mxu0 %v34
  %50 = vmatprep.subr.mxu0 0.0
  %51 = vmatpush1.msra.mxu0 0.0
  %52 = vmatprep.subr.mxu0 0.0
  %53 = vmatpush1.msra.mxu0 0.0
  %54 = vmatprep.subr.mxu0 0.0
  %55 = vmatpush1.msra.mxu0 0.0
  %56 = vmatprep.subr.mxu0 0.0
  %57 = vmatpush1.msra.mxu0 0.0
  %58 = vmatprep.subr.mxu0 0.0
  %59 = vmatpush1.msra.mxu0 0.0
  %60 = vmatprep.subr.mxu0 0.0
  %61 = vmatpush1.msra.mxu0 0.0
  %62 = vmatprep.subr.mxu0 0.0
  %63 = vmatpush1.msra.mxu0 0.0
  %64 = vmatprep.subr.mxu0 0.0
  %65 = vmatpush1.msra.mxu0 0.0
  %66 = vmatprep.subr.mxu0 0.0
  %67 = vmatpush1.msra.mxu0 0.0
  %68 = vmatprep.subr.mxu0 0.0
  %69 = vmatpush1.msra.mxu0 0.0
  %70 = vmatprep.subr.mxu0 0.0
  %71 = vmatpush1.msra.mxu0 0.0
  %72 = vmatprep.subr.mxu0 0.0
  %73 = vmatpush1.msra.mxu0 0.0
  %74 = vmatprep.subr.mxu0 0.0
  %75 = vmatpush1.msra.mxu0 0.0
  %76 = vmatprep.subr.mxu0 0.0
  %77 = vmatpush1.msra.mxu0 0.0
  %78 = vmatprep.subr.mxu0 0.0
  %79 = vmatpush1.msra.mxu0 0.0
  %80 = vmatprep.subr.mxu0 0.0
  %81 = vmatpush1.msra.mxu0 0.0
  %82 = vmatprep.subr.mxu0 0.0
  %83 = vmatpush1.msra.mxu0 0.0
  %84 = vmatprep.subr.mxu0 0.0
  %85 = vmatpush1.msra.mxu0 0.0
  %86 = vmatprep.subr.mxu0 0.0
  %87 = vmatpush1.msra.mxu0 0.0
  %88 = vmatprep.subr.mxu0 0.0
  %89 = vmatpush1.msra.mxu0 0.0
  %90 = vmatprep.subr.mxu0 0.0
  %91 = vmatpush1.msra.mxu0 0.0
  %92 = vmatprep.subr.mxu0 0.0
  %93 = vmatpush1.msra.mxu0 0.0
  %94 = vmatprep.subr.mxu0 0.0
  %95 = vmatpush1.msra.mxu0 0.0
  %96 = vmatprep.subr.mxu0 0.0
  %97 = vmatpush1.msra.mxu0 0.0
  %98 = vmatprep.subr.mxu0 0.0
  %99 = vmatpush1.msra.mxu0 0.0
  %100 = vmatprep.subr.mxu0 0.0
  %101 = vmatpush1.msra.mxu0 0.0
  %102 = vmatprep.subr.mxu0 0.0
  %103 = vmatpush1.msra.mxu0 0.0
  %104 = vmatprep.subr.mxu0 0.0
  %105 = vmatpush1.msra.mxu0 0.0
  %106 = vmatprep.subr.mxu0 0.0
  %107 = vmatpush1.msra.mxu0 0.0
  %108 = vmatprep.subr.mxu0 0.0
  %109 = vmatpush1.msra.mxu0 0.0
  %110 = vmatprep.mubr.f32.mxu0 0.0
  %111 = vmatmul.mubr.f32.gmra.mrb[0].mxu0 %v44
  %v112 = vpop.f32.mrb[0].mxu0
  %v113 = vadd.f32 %v40, %v112
  %v114 = vpop.f32.mrb[0].mxu0
  %115 = vdwg.mxu0
  %v116 = vmax.f32 %v113, 0.0
  %v117 = vld [vmem:[%s3] sm:$0xff]
  %v118 = vld [vmem:[%s3 + $0x8] sm:$0xff]
  %v119 = vld [vmem:[%s3 + $0x10] sm:$0xff]
  %v120 = vld [vmem:[%s3 + $0x18] sm:$0xff]
  %v121 = vld [vmem:[%s3 + $0x20] sm:$0xff]
  %v122 = vld [vmem:[%s3 + $0x28] sm:$0xff]
  %v123 = vld [vmem:[%s3 + $0x30] sm:$0xff]
  %v124 = vld [vmem:[%s3 + $0x38] sm:$0xff]
  %v125 = vld [vmem:[%s3 + $0x40] sm:$0xff]
  %v126 = vld [vmem:[%s3 + $0x48] sm:$0xff]
  %v127 = vld [vmem:[%s3 + $0x50] sm:$0xff]
  %v128 = vld [vmem:[%s3 + $0x58] sm:$0xff]
  %v129 = vld [vmem:[%s3 + $0x60] sm:$0xff]
  %v130 = vld [vmem:[%s3 + $0x68] sm:$0xff]
  %v131 = vld [vmem:[%s3 + $0x70] sm:$0xff]
  %v132 = vld [vmem:[%s3 + $0x78] sm:$0xff]
  %v133 = vld [vmem:[%s4] sm:$0x1]
  %v135 = vlaneseq
  %v136 = vshrl.u32 %v135, 7
  %v137 = vsub.s32 0, %v136
  %v138 = vrot.slane %v133, %v137
  %140 = vmatprep.subr.mxu0 0.0
  %141 = vmatpush1.msra.mxu0 %v117
  %142 = vmatprep.subr.mxu0 0.0
  %143 = vmatpush1.msra.mxu0 %v118
  %144 = vmatprep.subr.mxu0 0.0
  %145 = vmatpush1.msra.mxu0 %v119
  %146 = vmatprep.subr.mxu0 0.0
  %147 = vmatpush1.msra.mxu0 %v120
  %148 = vmatprep.subr.mxu0 0.0
  %149 = vmatpush1.msra.mxu0 %v121
  %150 = vmatprep.subr.mxu0 0.0
  %151 = vmatpush1.msra.mxu0 %v122
  %152 = vmatprep.subr.mxu0 0.0
  %153 = vmatpush1.msra.mxu0 %v123
  %154 = vmatprep.subr.mxu0 0.0
  %155 = vmatpush1.msra.mxu0 %v124
  %156 = vmatprep.subr.mxu0 0.0
  %157 = vmatpush1.msra.mxu0 %v125
  %158 = vmatprep.subr.mxu0 0.0
  %159 = vmatpush1.msra.mxu0 %v126
  %160 = vmatprep.subr.mxu0 0.0
  %161 = vmatpush1.msra.mxu0 %v127
  %162 = vmatprep.subr.mxu0 0.0
  %163 = vmatpush1.msra.mxu0 %v128
  %164 = vmatprep.subr.mxu0 0.0
  %165 = vmatpush1.msra.mxu0 %v129
  %166 = vmatprep.subr.mxu0 0.0
  %167 = vmatpush1.msra.mxu0 %v130
  %168 = vmatprep.subr.mxu0 0.0
  %169 = vmatpush1.msra.mxu0 %v131
  %170 = vmatprep.subr.mxu0 0.0
  %171 = vmatpush1.msra.mxu0 %v132
  %172 = vmatprep.subr.mxu0 0.0
  %173 = vmatpush1.msra.mxu0 0.0
  %174 = vmatprep.subr.mxu0 0.0
  %175 = vmatpush1.msra.mxu0 0.0
  %176 = vmatprep.subr.mxu0 0.0
  %177 = vmatpush1.msra.mxu0 0.0
  %178 = vmatprep.subr.mxu0 0.0
  %179 = vmatpush1.msra.mxu0 0.0
  %180 = vmatprep.subr.mxu0 0.0
  %181 = vmatpush1.msra.mxu0 0.0
  %182 = vmatprep.subr.mxu0 0.0
  %183 = vmatpush1.msra.mxu0 0.0
  %184 = vmatprep.subr.mxu0 0.0
  %185 = vmatpush1.msra.mxu0 0.0
  %186 = vmatprep.subr.mxu0 0.0
  %187 = vmatpush1.msra.mxu0 0.0
  %188 = vmatprep.subr.mxu0 0.0
  %189 = vmatpush1.msra.mxu0 0.0
  %190 = vmatprep.subr.mxu0 0.0
  %191 = vmatpush1.msra.mxu0 0.0
  %192 = vmatprep.subr.mxu0 0.0
  %193 = vmatpush1.msra.mxu0 0.0
  %194 = vmatprep.subr.mxu0 0.0
  %195 = vmatpush1.msra.mxu0 0.0
  %196 = vmatprep.subr.mxu0 0.0
  %197 = vmatpush1.msra.mxu0 0.0
  %198 = vmatprep.subr.mxu0 0.0
  %199 = vmatpush1.msra.mxu0 0.0
  %200 = vmatprep.subr.mxu0 0.0
  %201 = vmatpush1.msra.mxu0 0.0
  %202 = vmatprep.subr.mxu0 0.0
  %203 = vmatpush1.msra.mxu0 0.0
  %204 = vmatprep.mubr.f32.mxu0 0.0
  %205 = vmatmul.mubr.f32.gmra.mrb[0].mxu0 %v116
  %v206 = vpop.f32.mrb[0].mxu0
  %v207 = vadd.f32 %v138, %v206
  %v208 = vpop.f32.mrb[0].mxu0
  %209 = vdwg.mxu0
  %v210 = vmax.f32 %v207, 0.0
  %v211 = vld [vmem:[%s5] sm:$0xff]
  %v212 = vld [vmem:[%s5 + $0x8] sm:$0xff]
  %v213 = vld [vmem:[%s5 + $0x10] sm:$0xff]
  %v214 = vld [vmem:[%s5 + $0x18] sm:$0xff]
  %v215 = vld [vmem:[%s5 + $0x20] sm:$0xff]
  %v216 = vld [vmem:[%s5 + $0x28] sm:$0xff]
  %v217 = vld [vmem:[%s5 + $0x30] sm:$0xff]
  %v218 = vld [vmem:[%s5 + $0x38] sm:$0xff]
  %v219 = vld [vmem:[%s5 + $0x40] sm:$0xff]
  %v220 = vld [vmem:[%s5 + $0x48] sm:$0xff]
  %v221 = vld [vmem:[%s5 + $0x50] sm:$0xff]
  %v222 = vld [vmem:[%s5 + $0x58] sm:$0xff]
  %v223 = vld [vmem:[%s5 + $0x60] sm:$0xff]
  %v224 = vld [vmem:[%s5 + $0x68] sm:$0xff]
  %v225 = vld [vmem:[%s5 + $0x70] sm:$0xff]
  %v226 = vld [vmem:[%s5 + $0x78] sm:$0xff]
  %v227 = vld [vmem:[%s5 + $0x80] sm:$0xff]
  %v228 = vld [vmem:[%s5 + $0x88] sm:$0xff]
  %v229 = vld [vmem:[%s5 + $0x90] sm:$0xff]
  %v230 = vld [vmem:[%s5 + $0x98] sm:$0xff]
  %v231 = vld [vmem:[%s5 + $0xa0] sm:$0xff]
  %v232 = vld [vmem:[%s5 + $0xa8] sm:$0xff]
  %v233 = vld [vmem:[%s5 + $0xb0] sm:$0xff]
  %v234 = vld [vmem:[%s5 + $0xb8] sm:$0xff]
  %v235 = vld [vmem:[%s5 + $0xc0] sm:$0xff]
  %v236 = vld [vmem:[%s5 + $0xc8] sm:$0xff]
  %v237 = vld [vmem:[%s5 + $0xd0] sm:$0xff]
  %v238 = vld [vmem:[%s5 + $0xd8] sm:$0xff]
  %v239 = vld [vmem:[%s5 + $0xe0] sm:$0xff]
  %v240 = vld [vmem:[%s5 + $0xe8] sm:$0xff]
  %v241 = vld [vmem:[%s5 + $0xf0] sm:$0xff]
  %v242 = vld [vmem:[%s5 + $0xf8] sm:$0xff]
  %v243 = vld [vmem:[%s6] sm:$0x3]
  %v245 = vlaneseq
  %v246 = vshrl.u32 %v245, 7
  %v247 = vsub.s32 0, %v246
  %v248 = vrot.slane %v243, %v247
  %v249 = vlaneseq
  %v250 = vshrl.u32 %v249, 7
  %v251 = vsub.s32 1, %v250
  %v252 = vrot.slane %v243, %v251
  %255 = vmatprep.subr.mxu0 %v212
  %256 = vmatpush1.msra.mxu0 %v211
  %257 = vmatprep.subr.mxu0 %v214
  %258 = vmatpush1.msra.mxu0 %v213
  %259 = vmatprep.subr.mxu0 %v216
  %260 = vmatpush1.msra.mxu0 %v215
  %261 = vmatprep.subr.mxu0 %v218
  %262 = vmatpush1.msra.mxu0 %v217
  %263 = vmatprep.subr.mxu0 %v220
  %264 = vmatpush1.msra.mxu0 %v219
  %265 = vmatprep.subr.mxu0 %v222
  %266 = vmatpush1.msra.mxu0 %v221
  %267 = vmatprep.subr.mxu0 %v224
  %268 = vmatpush1.msra.mxu0 %v223
  %269 = vmatprep.subr.mxu0 %v226
  %270 = vmatpush1.msra.mxu0 %v225
  %271 = vmatprep.subr.mxu0 %v228
  %272 = vmatpush1.msra.mxu0 %v227
  %273 = vmatprep.subr.mxu0 %v230
  %274 = vmatpush1.msra.mxu0 %v229
  %275 = vmatprep.subr.mxu0 %v232
  %276 = vmatpush1.msra.mxu0 %v231
  %277 = vmatprep.subr.mxu0 %v234
  %278 = vmatpush1.msra.mxu0 %v233
  %279 = vmatprep.subr.mxu0 %v236
  %280 = vmatpush1.msra.mxu0 %v235
  %281 = vmatprep.subr.mxu0 %v238
  %282 = vmatpush1.msra.mxu0 %v237
  %283 = vmatprep.subr.mxu0 %v240
  %284 = vmatpush1.msra.mxu0 %v239
  %285 = vmatprep.subr.mxu0 %v242
  %286 = vmatpush1.msra.mxu0 %v241
  %287 = vmatprep.subr.mxu0 0.0
  %288 = vmatpush1.msra.mxu0 0.0
  %289 = vmatprep.subr.mxu0 0.0
  %290 = vmatpush1.msra.mxu0 0.0
  %291 = vmatprep.subr.mxu0 0.0
  %292 = vmatpush1.msra.mxu0 0.0
  %293 = vmatprep.subr.mxu0 0.0
  %294 = vmatpush1.msra.mxu0 0.0
  %295 = vmatprep.subr.mxu0 0.0
  %296 = vmatpush1.msra.mxu0 0.0
  %297 = vmatprep.subr.mxu0 0.0
  %298 = vmatpush1.msra.mxu0 0.0
  %299 = vmatprep.subr.mxu0 0.0
  %300 = vmatpush1.msra.mxu0 0.0
  %301 = vmatprep.subr.mxu0 0.0
  %302 = vmatpush1.msra.mxu0 0.0
  %303 = vmatprep.subr.mxu0 0.0
  %304 = vmatpush1.msra.mxu0 0.0
  %305 = vmatprep.subr.mxu0 0.0
  %306 = vmatpush1.msra.mxu0 0.0
  %307 = vmatprep.subr.mxu0 0.0
  %308 = vmatpush1.msra.mxu0 0.0
  %309 = vmatprep.subr.mxu0 0.0
  %310 = vmatpush1.msra.mxu0 0.0
  %311 = vmatprep.subr.mxu0 0.0
  %312 = vmatpush1.msra.mxu0 0.0
  %313 = vmatprep.subr.mxu0 0.0
  %314 = vmatpush1.msra.mxu0 0.0
  %315 = vmatprep.subr.mxu0 0.0
  %316 = vmatpush1.msra.mxu0 0.0
  %317 = vmatprep.subr.mxu0 0.0
  %318 = vmatpush1.msra.mxu0 0.0
  %319 = vmatprep.mubr.f32.mxu0 0.0
  %320 = vmatmul.mubr.f32.gmra.mrb[0].mxu0 %v210
  %v321 = vpop.f32.mrb[0].mxu0
  %v322 = vadd.f32 %v248, %v321
  %v323 = vpop.f32.mrb[0].mxu0
  %v324 = vadd.f32 %v252, %v323
  %325 = vdwg.mxu0
  %v326 = vmax.f32 %v322, 0.0
  %v327 = vmax.f32 %v324, 0.0
  %v328 = vld [vmem:[%s7] sm:$0x3]
  %v330 = vlaneseq
  %v331 = vshrl.u32 %v330, 7
  %v332 = vsub.s32 0, %v331
  %v333 = vrot.slane %v328, %v332
  %v334 = vlaneseq
  %v335 = vshrl.u32 %v334, 7
  %v336 = vsub.s32 1, %v335
  %v337 = vrot.slane %v328, %v336
  %v340 = vmul.f32 %v326, %v333
  %v341 = vmul.f32 %v327, %v337
  %vm342 = vcmask 523264
  %v343 = vsel %vm342, %v340, 0.0
  %344 = vadd.xlane.f32.xlu0 %v343
  %v345 = vpop.xlane.xlu0 %344
  %347 = vrot.lane.b32.xlu0 %v340, 64
  %v348 = vpop.permute.xlu0 %347
  %v350 = vsel %vm342, %v348, 0.0
  %351 = vadd.xlane.f32.xlu0 %v350
  %v352 = vpop.xlane.xlu0 %351
  %v353 = vsel %vm342, %v341, 0.0
  %354 = vadd.xlane.f32.xlu0 %v353
  %v355 = vpop.xlane.xlu0 %354
  %v356 = vlaneseq
  %v357 = vand.u32 %v356, 127
  %vm358 = vcmp.eq.s32.totalorder %v357, 0
  %vm359 = vcmp.eq.s32.totalorder %v357, 1
  %v360 = vsel %vm359, %v352, %v355
  %v361 = vsel %vm358, %v345, %v360
  %v362 = vld [vmem:[%s8] sm:$0x1]
  %v364 = vlaneseq
  %v365 = vshrl.u32 %v364, 7
  %v366 = vsub.s32 0, %v365
  %v367 = vrot.slane %v362, %v366
  %v369 = vadd.f32 %v361, %v367
  %v370 = vxor.u32 %v369, 2147483648
  %v371 = vmul.f32 %v370, 1.442695
  %v372 = vpow.pop %v371
  %v373 = vadd.f32 %v372, 1.0
  %v374 = vrcp.pop %v373
  %v375 = vmul.f32 1.0, %v374
  %vm376 = vcmp.eq.s32.totalorder %v357, 2
  %v377 = vtanh.pop %v369
  %v378 = vsel %vm376, %v377, %v369
  %v379 = vsel %vm358, %v375, %v378
  %vm380 = vcmask 23552
  %381 = vst.msk [vmem:[%s9] sm:$0xff] %vm380, %v379
  // Predicated region
  $region38: #{tpu_custom_call.1} parent=0 // pred_check
    _
  $region39: #{tpu_custom_call.1} parent=0 // pred_check_branch
    %383 = sbr.rel (0) target = $region41
  $region40: #{tpu_custom_call.1} parent=0 // pred_region
    _
  $region41: #{tpu_custom_call.1} parent=0 // pred_fallthru
    _
  // Predicated region
  $region42: #{tpu_custom_call.1} parent=0 // pred_check
    _
  $region43: #{tpu_custom_call.1} parent=0 // pred_check_branch
    %385 = sbr.rel (0) target = $region45
  $region44: #{tpu_custom_call.1} parent=0 // pred_region
    _
  $region45: #{tpu_custom_call.1} parent=0 // pred_fallthru
    _

</llo_original>
